<compile_context>
chip_gen: v5e
topology: v5e:2x2
jax: 0.10.0
libtpu: 0.0.40
codegen_flags: <defaults>
</compile_context>

<pallas_src>
import functools

import jax
import jax.numpy as jnp
from jax.experimental import pallas as pl
from jax.experimental.pallas import tpu as pltpu


# ----------------------------------------------------------------------------
# Pallas kernel: fused 3x3 conv + 1x1 flow, folded weights, in-kernel im2col
# ----------------------------------------------------------------------------
def _scoreflow_kernel(xp_ref, weff_ref, beff_ref, z_ref, *, H, W):
    """Fused conv+flow for a block of `nb` images.

    xp_ref:   (nb, C, HWP) f32 -- flattened images with a zero halo of W+1 lanes
                                  on each side (HWP = H*W + 2*W + 2).
    weff_ref: (9, C, C)    f32 -- folded per-tap weights, tap = kh*3 + kw.
    beff_ref: (C, 1)       f32 -- folded bias.
    z_ref:    (nb, C, HW)  f32 -- output: channels in sublanes, spatial in lanes.
    """
    nb, C, _ = xp_ref.shape
    HW = H * W

    weff = weff_ref[...]                      # (9, C, C)
    bias = beff_ref[...]                      # (C, 1)

    # Column index of every spatial lane; masks the horizontal wrap of the
    # flattened-row shifts (vertical out-of-bounds reads hit the zero halo).
    col = jax.lax.broadcasted_iota(jnp.int32, (C, HW), 1) % W
    mask_l = col >= 1                         # valid lanes when reading column w-1
    mask_r = col <= W - 2                     # valid lanes when reading column w+1

    for b in range(nb):                       # static unroll over images in block
        xi = xp_ref[b]                        # (C, HWP) -- single load, sliced 9x
        acc = jnp.zeros((C, HW), jnp.float32)
        for kh in range(3):
            for kw in range(3):
                dh, dw = kh - 1, kw - 1
                start = (W + 1) + dh * W + dw
                xs = xi[:, start:start + HW]  # (C, HW) static lane-offset slice
                if dw == -1:
                    xs = jnp.where(mask_l, xs, 0.0)
                elif dw == 1:
                    xs = jnp.where(mask_r, xs, 0.0)
                acc = acc + jnp.dot(weff[kh * 3 + kw], xs,
                                    preferred_element_type=jnp.float32)
        z_ref[b] = acc + bias                 # lane-dense (C, HW) store


def _pick_batch_block(N, per_image_bytes, budget=2 << 20):
    """Images per grid step: fill ~`budget` of VMEM but keep >= 2 grid steps."""
    cap = max(1, budget // max(per_image_bytes, 1))
    if N >= 2:
        cap = min(cap, max(1, N // 2))        # >= 2 steps for v7x megacore
    nb = 1
    for d in range(1, min(cap, N) + 1):       # largest divisor of N that fits
        if N % d == 0:
            nb = d
    return nb


def _scoreflow_pallas(xp, weff, beff, *, N, C, H, W):
    HW = H * W
    HWP = HW + 2 * W + 2
    nb = _pick_batch_block(N, C * HWP * 4)
    kernel = functools.partial(_scoreflow_kernel, H=H, W=W)
    return pl.pallas_call(
        kernel,
        out_shape=jax.ShapeDtypeStruct((N, C, HW), jnp.float32),
        grid_spec=pltpu.PrefetchScalarGridSpec(
            num_scalar_prefetch=0,
            grid=(N // nb,),
            in_specs=[
                pl.BlockSpec((nb, C, HWP), lambda i: (i, 0, 0)),
                pl.BlockSpec((9, C, C), lambda i: (0, 0, 0)),
                pl.BlockSpec((C, 1), lambda i: (0, 0)),
            ],
            out_specs=pl.BlockSpec((nb, C, HW), lambda i: (i, 0, 0)),
        ),
        compiler_params=pltpu.CompilerParams(
            dimension_semantics=("parallel",),
            vmem_limit_bytes=32 * 1024 * 1024),
    )(xp, weff, beff)


# ----------------------------------------------------------------------------
# Wrapper: fold weights, add flat zero halo (plain JAX glue), NCHW in / NCHW out
# ----------------------------------------------------------------------------
@jax.jit
def scoreflow_forward(x, conv_w, conv_b, flow_w):
    """Equivalent of ScoreFlow.forward: returns (z, log_jac_det).

    x:       (N, C, H, W) float32   (NCHW, PyTorch convention)
    conv_w:  (C, C, 3, 3)           scorenet conv weight (OIHW)
    conv_b:  (C,)                   scorenet conv bias
    flow_w:  (C, C)                 invertible 1x1 flow weight
    """
    N, C, H, W = x.shape
    HW = H * W

    # Fold the invertible 1x1 flow into the conv (linear ops compose):
    #   W_eff[kh,kw] = flow_w @ conv_w[:, :, kh, kw],   b_eff = flow_w @ conv_b
    weff = jnp.einsum('fo,oikl->klfi', flow_w, conv_w).reshape(9, C, C)
    beff = (flow_w @ conv_b).reshape(C, 1)

    # Flatten spatial dims (free reshape) and add a flat zero halo of W+1 lanes
    # on each side so every conv tap is a static lane-offset slice in the kernel.
    xp = jnp.pad(x.reshape(N, C, HW), ((0, 0), (0, 0), (W + 1, W + 1)))

    z_flat = _scoreflow_pallas(xp, weff, beff, N=N, C=C, H=H, W=W)  # (N, C, HW)
    z = z_flat.reshape(N, C, H, W)            # already NCHW -- no transpose

    # log|det| of the 1x1 flow Jacobian, applied at every spatial location.
    _, logabsdet = jnp.linalg.slogdet(flow_w)
    log_jac_det = jnp.full((N,), H * W * logabsdet, dtype=jnp.float32)
    return z, log_jac_det


def scoreflow_log_density(x, conv_w, conv_b, flow_w):
    """Equivalent of ScoreFlow.log_density."""
    z, log_jac_det = scoreflow_forward(x, conv_w, conv_b, flow_w)
    logpz = -0.5 * jnp.sum(z ** 2, axis=1, keepdims=True) \
        + log_jac_det.reshape(z.shape[0], *([1] * (z.ndim - 1)))
    return logpz


# ----------------------------------------------------------------------------
# Deterministic parameter init (xavier_uniform weights, zero bias -- the
# `fastflow=True` init path of ScoreFlow.__init__)
# ----------------------------------------------------------------------------
def init_params(key, C):
    k1, k2 = jax.random.split(key)
    fan_in, fan_out = C * 9, C * 9
    limit = (6.0 / (fan_in + fan_out)) ** 0.5
    conv_w = jax.random.uniform(k1, (C, C, 3, 3), jnp.float32, -limit, limit)
    conv_b = jnp.zeros((C,), jnp.float32)
    a = jax.random.normal(k2, (C, C), jnp.float32)
    flow_w, _ = jnp.linalg.qr(a)              # orthogonal -> invertible
    return conv_w, conv_b, flow_w


if __name__ == "__main__":
    key = jax.random.PRNGKey(0)
    kx, kp = jax.random.split(key)

    N, C, H, W = 2, 4, 16, 16
    x = jax.random.normal(kx, (N, C, H, W), jnp.float32)
    conv_w, conv_b, flow_w = init_params(kp, C)

    z, log_jac_det = scoreflow_forward(x, conv_w, conv_b, flow_w)
    jax.block_until_ready((z, log_jac_det))

    # Independent pure-JAX/XLA reference of the same math (unfolded path).
    scores_ref = jax.lax.conv_general_dilated(
        x, conv_w, window_strides=(1, 1), padding="SAME",
        dimension_numbers=("NCHW", "OIHW", "NCHW")) + conv_b[None, :, None, None]
    z_ref = jnp.einsum('fo,nohw->nfhw', flow_w, scores_ref)

    assert z.shape == (N, C, H, W)
    assert log_jac_det.shape == (N,)
    assert jnp.allclose(z, z_ref, atol=1e-3, rtol=1e-3), \
        float(jnp.max(jnp.abs(z - z_ref)))

    logpz = scoreflow_log_density(x, conv_w, conv_b, flow_w)
    jax.block_until_ready(logpz)
    assert logpz.shape == (N, 1, H, W)

    print("KERNEL_OK")
</pallas_src>

<mosaic_0001>
module attributes {stable_mosaic.version = 11 : i64} {
  func.func @_scoreflow_kernel(%arg0: i32, %arg1: memref<1x4x290xf32, #tpu.memory_space<vmem>>, %arg2: memref<9x4x4xf32, #tpu.memory_space<vmem>>, %arg3: memref<4x1xf32, #tpu.memory_space<vmem>>, %arg4: memref<1x4x256xf32, #tpu.memory_space<vmem>>) attributes {dimension_semantics = [#tpu.dimension_semantics<parallel>], iteration_bounds = array<i64: 2>, scalar_prefetch = 0 : i64, scratch_operands = 0 : i64, tpu.core_type = #tpu.core_type<tc>, window_params = [{transform_indices = @transform_0, window_bounds = array<i64: 1, 4, 290>}, {pipeline_mode = #tpu.pipeline_mode<synchronous>, transform_indices = @transform_1, window_bounds = array<i64: 9, 4, 4>}, {pipeline_mode = #tpu.pipeline_mode<synchronous>, transform_indices = @transform_2, window_bounds = array<i64: 4, 1>}, {transform_indices = @transform_3, window_bounds = array<i64: 1, 4, 256>}]} {
    %c0 = arith.constant 0 : index
    %c0_0 = arith.constant 0 : index
    %c0_1 = arith.constant 0 : index
    %0 = vector.load %arg2[%c0, %c0_0, %c0_1] : memref<9x4x4xf32, #tpu.memory_space<vmem>>, vector<9x4x4xf32>
    %c0_2 = arith.constant 0 : index
    %c0_3 = arith.constant 0 : index
    %1 = vector.load %arg3[%c0_2, %c0_3] : memref<4x1xf32, #tpu.memory_space<vmem>>, vector<4x1xf32>
    %2 = tpu.iota {dimensions = array<i32: 1>} : vector<4x256xi32>
    %c16_i32 = arith.constant 16 : i32
    %c0_i32 = arith.constant 0 : i32
    %3 = arith.cmpi eq, %c16_i32, %c0_i32 : i32
    %c1_i32 = arith.constant 1 : i32
    %4 = arith.select %3, %c1_i32, %c16_i32 : i32
    %5 = vector.broadcast %4 : i32 to vector<4x256xi32>
    %6 = arith.remsi %2, %5 : vector<4x256xi32>
    %c0_i32_4 = arith.constant 0 : i32
    %7 = vector.broadcast %c0_i32_4 : i32 to vector<4x256xi32>
    %8 = arith.cmpi ne, %6, %7 : vector<4x256xi32>
    %c0_i32_5 = arith.constant 0 : i32
    %9 = vector.broadcast %c0_i32_5 : i32 to vector<4x256xi32>
    %10 = arith.cmpi slt, %6, %9 : vector<4x256xi32>
    %c0_i32_6 = arith.constant 0 : i32
    %11 = arith.cmpi slt, %4, %c0_i32_6 : i32
    %12 = vector.broadcast %11 : i1 to vector<4x256xi1>
    %13 = vector.broadcast %12 : vector<4x256xi1> to vector<4x256xi1>
    %14 = arith.xori %10, %13 : vector<4x256xi1>
    %15 = arith.andi %14, %8 : vector<4x256xi1>
    %16 = vector.broadcast %4 : i32 to vector<4x256xi32>
    %17 = arith.addi %6, %16 : vector<4x256xi32>
    %18 = arith.select %15, %17, %6 : vector<4x256xi1>, vector<4x256xi32>
    %c1_i32_7 = arith.constant 1 : i32
    %19 = vector.broadcast %c1_i32_7 : i32 to vector<4x256xi32>
    %20 = arith.cmpi sge, %18, %19 : vector<4x256xi32>
    %c14_i32 = arith.constant 14 : i32
    %21 = vector.broadcast %c14_i32 : i32 to vector<4x256xi32>
    %22 = arith.cmpi sle, %18, %21 : vector<4x256xi32>
    %c0_8 = arith.constant 0 : index
    %c0_9 = arith.constant 0 : index
    %c0_10 = arith.constant 0 : index
    %23 = vector.load %arg1[%c0_8, %c0_9, %c0_10] : memref<1x4x290xf32, #tpu.memory_space<vmem>>, vector<1x4x290xf32>
    %24 = vector.shape_cast %23 : vector<1x4x290xf32> to vector<4x290xf32>
    %cst = arith.constant 0.000000e+00 : f32
    %25 = vector.broadcast %cst : f32 to vector<4x256xf32>
    %26 = vector.extract_strided_slice %24 {offsets = [0, 0], sizes = [4, 256], strides = [1, 1]} : vector<4x290xf32> to vector<4x256xf32>
    %cst_11 = arith.constant 0.000000e+00 : f32
    %27 = vector.broadcast %cst_11 : f32 to vector<4x256xf32>
    %28 = arith.select %20, %26, %27 : vector<4x256xi1>, vector<4x256xf32>
    %29 = vector.extract_strided_slice %0 {offsets = [0, 0, 0], sizes = [1, 4, 4], strides = [1, 1, 1]} : vector<9x4x4xf32> to vector<1x4x4xf32>
    %30 = vector.shape_cast %29 : vector<1x4x4xf32> to vector<4x4xf32>
    %cst_12 = arith.constant dense<0.000000e+00> : vector<4x256xf32>
    %31 = tpu.matmul %30, %28, %cst_12 {dimension_numbers = #tpu.dot_dimension_numbers<[1], [0], [0], [1], [0, 0, 1, 1], [], []>} : vector<4x4xf32>, vector<4x256xf32>, vector<4x256xf32> -> vector<4x256xf32>
    %32 = arith.addf %25, %31 : vector<4x256xf32>
    %33 = vector.extract_strided_slice %24 {offsets = [0, 1], sizes = [4, 256], strides = [1, 1]} : vector<4x290xf32> to vector<4x256xf32>
    %34 = vector.extract_strided_slice %0 {offsets = [1, 0, 0], sizes = [1, 4, 4], strides = [1, 1, 1]} : vector<9x4x4xf32> to vector<1x4x4xf32>
    %35 = vector.shape_cast %34 : vector<1x4x4xf32> to vector<4x4xf32>
    %cst_13 = arith.constant dense<0.000000e+00> : vector<4x256xf32>
    %36 = tpu.matmul %35, %33, %cst_13 {dimension_numbers = #tpu.dot_dimension_numbers<[1], [0], [0], [1], [0, 0, 1, 1], [], []>} : vector<4x4xf32>, vector<4x256xf32>, vector<4x256xf32> -> vector<4x256xf32>
    %37 = arith.addf %32, %36 : vector<4x256xf32>
    %38 = vector.extract_strided_slice %24 {offsets = [0, 2], sizes = [4, 256], strides = [1, 1]} : vector<4x290xf32> to vector<4x256xf32>
    %cst_14 = arith.constant 0.000000e+00 : f32
    %39 = vector.broadcast %cst_14 : f32 to vector<4x256xf32>
    %40 = arith.select %22, %38, %39 : vector<4x256xi1>, vector<4x256xf32>
    %41 = vector.extract_strided_slice %0 {offsets = [2, 0, 0], sizes = [1, 4, 4], strides = [1, 1, 1]} : vector<9x4x4xf32> to vector<1x4x4xf32>
    %42 = vector.shape_cast %41 : vector<1x4x4xf32> to vector<4x4xf32>
    %cst_15 = arith.constant dense<0.000000e+00> : vector<4x256xf32>
    %43 = tpu.matmul %42, %40, %cst_15 {dimension_numbers = #tpu.dot_dimension_numbers<[1], [0], [0], [1], [0, 0, 1, 1], [], []>} : vector<4x4xf32>, vector<4x256xf32>, vector<4x256xf32> -> vector<4x256xf32>
    %44 = arith.addf %37, %43 : vector<4x256xf32>
    %45 = vector.extract_strided_slice %24 {offsets = [0, 16], sizes = [4, 256], strides = [1, 1]} : vector<4x290xf32> to vector<4x256xf32>
    %cst_16 = arith.constant 0.000000e+00 : f32
    %46 = vector.broadcast %cst_16 : f32 to vector<4x256xf32>
    %47 = arith.select %20, %45, %46 : vector<4x256xi1>, vector<4x256xf32>
    %48 = vector.extract_strided_slice %0 {offsets = [3, 0, 0], sizes = [1, 4, 4], strides = [1, 1, 1]} : vector<9x4x4xf32> to vector<1x4x4xf32>
    %49 = vector.shape_cast %48 : vector<1x4x4xf32> to vector<4x4xf32>
    %cst_17 = arith.constant dense<0.000000e+00> : vector<4x256xf32>
    %50 = tpu.matmul %49, %47, %cst_17 {dimension_numbers = #tpu.dot_dimension_numbers<[1], [0], [0], [1], [0, 0, 1, 1], [], []>} : vector<4x4xf32>, vector<4x256xf32>, vector<4x256xf32> -> vector<4x256xf32>
    %51 = arith.addf %44, %50 : vector<4x256xf32>
    %52 = vector.extract_strided_slice %24 {offsets = [0, 17], sizes = [4, 256], strides = [1, 1]} : vector<4x290xf32> to vector<4x256xf32>
    %53 = vector.extract_strided_slice %0 {offsets = [4, 0, 0], sizes = [1, 4, 4], strides = [1, 1, 1]} : vector<9x4x4xf32> to vector<1x4x4xf32>
    %54 = vector.shape_cast %53 : vector<1x4x4xf32> to vector<4x4xf32>
    %cst_18 = arith.constant dense<0.000000e+00> : vector<4x256xf32>
    %55 = tpu.matmul %54, %52, %cst_18 {dimension_numbers = #tpu.dot_dimension_numbers<[1], [0], [0], [1], [0, 0, 1, 1], [], []>} : vector<4x4xf32>, vector<4x256xf32>, vector<4x256xf32> -> vector<4x256xf32>
    %56 = arith.addf %51, %55 : vector<4x256xf32>
    %57 = vector.extract_strided_slice %24 {offsets = [0, 18], sizes = [4, 256], strides = [1, 1]} : vector<4x290xf32> to vector<4x256xf32>
    %cst_19 = arith.constant 0.000000e+00 : f32
    %58 = vector.broadcast %cst_19 : f32 to vector<4x256xf32>
    %59 = arith.select %22, %57, %58 : vector<4x256xi1>, vector<4x256xf32>
    %60 = vector.extract_strided_slice %0 {offsets = [5, 0, 0], sizes = [1, 4, 4], strides = [1, 1, 1]} : vector<9x4x4xf32> to vector<1x4x4xf32>
    %61 = vector.shape_cast %60 : vector<1x4x4xf32> to vector<4x4xf32>
    %cst_20 = arith.constant dense<0.000000e+00> : vector<4x256xf32>
    %62 = tpu.matmul %61, %59, %cst_20 {dimension_numbers = #tpu.dot_dimension_numbers<[1], [0], [0], [1], [0, 0, 1, 1], [], []>} : vector<4x4xf32>, vector<4x256xf32>, vector<4x256xf32> -> vector<4x256xf32>
    %63 = arith.addf %56, %62 : vector<4x256xf32>
    %64 = vector.extract_strided_slice %24 {offsets = [0, 32], sizes = [4, 256], strides = [1, 1]} : vector<4x290xf32> to vector<4x256xf32>
    %cst_21 = arith.constant 0.000000e+00 : f32
    %65 = vector.broadcast %cst_21 : f32 to vector<4x256xf32>
    %66 = arith.select %20, %64, %65 : vector<4x256xi1>, vector<4x256xf32>
    %67 = vector.extract_strided_slice %0 {offsets = [6, 0, 0], sizes = [1, 4, 4], strides = [1, 1, 1]} : vector<9x4x4xf32> to vector<1x4x4xf32>
    %68 = vector.shape_cast %67 : vector<1x4x4xf32> to vector<4x4xf32>
    %cst_22 = arith.constant dense<0.000000e+00> : vector<4x256xf32>
    %69 = tpu.matmul %68, %66, %cst_22 {dimension_numbers = #tpu.dot_dimension_numbers<[1], [0], [0], [1], [0, 0, 1, 1], [], []>} : vector<4x4xf32>, vector<4x256xf32>, vector<4x256xf32> -> vector<4x256xf32>
    %70 = arith.addf %63, %69 : vector<4x256xf32>
    %71 = vector.extract_strided_slice %24 {offsets = [0, 33], sizes = [4, 256], strides = [1, 1]} : vector<4x290xf32> to vector<4x256xf32>
    %72 = vector.extract_strided_slice %0 {offsets = [7, 0, 0], sizes = [1, 4, 4], strides = [1, 1, 1]} : vector<9x4x4xf32> to vector<1x4x4xf32>
    %73 = vector.shape_cast %72 : vector<1x4x4xf32> to vector<4x4xf32>
    %cst_23 = arith.constant dense<0.000000e+00> : vector<4x256xf32>
    %74 = tpu.matmul %73, %71, %cst_23 {dimension_numbers = #tpu.dot_dimension_numbers<[1], [0], [0], [1], [0, 0, 1, 1], [], []>} : vector<4x4xf32>, vector<4x256xf32>, vector<4x256xf32> -> vector<4x256xf32>
    %75 = arith.addf %70, %74 : vector<4x256xf32>
    %76 = vector.extract_strided_slice %24 {offsets = [0, 34], sizes = [4, 256], strides = [1, 1]} : vector<4x290xf32> to vector<4x256xf32>
    %cst_24 = arith.constant 0.000000e+00 : f32
    %77 = vector.broadcast %cst_24 : f32 to vector<4x256xf32>
    %78 = arith.select %22, %76, %77 : vector<4x256xi1>, vector<4x256xf32>
    %79 = vector.extract_strided_slice %0 {offsets = [8, 0, 0], sizes = [1, 4, 4], strides = [1, 1, 1]} : vector<9x4x4xf32> to vector<1x4x4xf32>
    %80 = vector.shape_cast %79 : vector<1x4x4xf32> to vector<4x4xf32>
    %cst_25 = arith.constant dense<0.000000e+00> : vector<4x256xf32>
    %81 = tpu.matmul %80, %78, %cst_25 {dimension_numbers = #tpu.dot_dimension_numbers<[1], [0], [0], [1], [0, 0, 1, 1], [], []>} : vector<4x4xf32>, vector<4x256xf32>, vector<4x256xf32> -> vector<4x256xf32>
    %82 = arith.addf %75, %81 : vector<4x256xf32>
    %83 = vector.broadcast %1 : vector<4x1xf32> to vector<4x256xf32>
    %84 = arith.addf %82, %83 : vector<4x256xf32>
    %c0_26 = arith.constant 0 : index
    %c0_27 = arith.constant 0 : index
    %c0_28 = arith.constant 0 : index
    %85 = vector.load %arg4[%c0_26, %c0_27, %c0_28] : memref<1x4x256xf32, #tpu.memory_space<vmem>>, vector<1x4x256xf32>
    %86 = vector.shape_cast %85 : vector<1x4x256xf32> to vector<4x256xf32>
    %87 = vector.shape_cast %84 : vector<4x256xf32> to vector<1x4x256xf32>
    tpu.vector_store %arg4[%c0_26, %c0_27, %c0_28], %87 {strides = array<i32>} : memref<1x4x256xf32, #tpu.memory_space<vmem>>, vector<1x4x256xf32>,
    return
  }
  func.func @transform_0(%arg0: i32) -> (i32, i32, i32) {
    %c0_i32 = arith.constant 0 : i32
    %c0_i32_0 = arith.constant 0 : i32
    %c0_i32_1 = arith.constant 0 : i32
    return %arg0, %c0_i32, %c0_i32_0 : i32, i32, i32
  }
  func.func @transform_1(%arg0: i32) -> (i32, i32, i32) {
    %c0_i32 = arith.constant 0 : i32
    %c0_i32_0 = arith.constant 0 : i32
    %c0_i32_1 = arith.constant 0 : i32
    %c0_i32_2 = arith.constant 0 : i32
    return %c0_i32, %c0_i32_0, %c0_i32_1 : i32, i32, i32
  }
  func.func @transform_2(%arg0: i32) -> (i32, i32) {
    %c0_i32 = arith.constant 0 : i32
    %c0_i32_0 = arith.constant 0 : i32
    %c0_i32_1 = arith.constant 0 : i32
    return %c0_i32, %c0_i32_0 : i32, i32
  }
  func.func @transform_3(%arg0: i32) -> (i32, i32, i32) {
    %c0_i32 = arith.constant 0 : i32
    %c0_i32_0 = arith.constant 0 : i32
    %c0_i32_1 = arith.constant 0 : i32
    return %arg0, %c0_i32, %c0_i32_0 : i32, i32, i32
  }
}

</mosaic_0001>

<llo_original>
// kernel: custom-call.2
$region0: #{custom-call.2}
  %s0 = inlined_call_operand.vmem [shape: f32[4,4], index: 0, kind: input, shape index: {}]
  %s1 = inlined_call_operand.vmem [shape: f32[4,4], index: 1, kind: output, shape index: {0}]
  %s2 = inlined_call_operand.hbm [shape: s32[4], index: 2, kind: output, shape index: {1}]
  %s3 = inlined_call_operand.hbm [shape: s32[4], index: 3, kind: output, shape index: {2}]
  %4 = xla_tuple %s1, %s2, %s3
  $region1: #{custom-call.2} parent=0
    #allocation0 [shape = 'u8[4096]{0}', space=vmem, size = 0x1000, scoped, tag = 'operand span for operand 0']
    #allocation1 [shape = 'u8[2048]{0}', space=vmem, size = 0x800, scoped, tag = 'packed  for operand 0']
    #allocation2 [shape = 'u8[4096]{0}', space=vmem, size = 0x1000, scoped, tag = 'operand span for operand 1']
    #allocation3 [shape = 'u8[2048]{0}', space=vmem, size = 0x800, scoped, tag = 'packed  for operand 1']
    #allocation4 [shape = 'u8[4096]{0}', space=vmem, size = 0x1000, scoped, tag = 'operand span for operand 2']
    #allocation5 [shape = 'u8[512]{0}', space=vmem, size = 0x400, scoped, tag = 'packed  for operand 2']
    #allocation6 [shape = 's32[1]{0}', space=sflag, size = 0x4, scoped, tag = 'scoped memory for custom-call.2']
    #allocation7 [shape = 'u8[4096]{0}', space=vmem, size = 0x1000, scoped, tag = 'operand span for operand 3']
    #allocation8 [shape = 'u8[512]{0}', space=vmem, size = 0x400, scoped, tag = 'packed  for operand 3']
    #allocation9 [shape = 's32[1]{0}', space=sflag, size = 0x4, scoped, tag = 'scoped memory for custom-call.2']
    #allocation10 [shape = 's32[4,128]{1,0}', space=vmem, size = 0x1000, scoped, tag = 'scratch for permutations']
    %5 = vsyncpa [#allocation6], 0
    %6 = vsyncpa [#allocation9], 0
    // Predicated region
    $region2: #{custom-call.2} parent=1 // pred_check
      _
    $region3: #{custom-call.2} parent=1 // pred_check_branch
      %8 = sbr.rel (0) target = $region5
    $region4: #{custom-call.2} parent=1 // pred_region
      %p10 = scmp.gt.s32.totalorder 0, 0
      // Predicated region
      $region6: #{custom-call.2} parent=4 // pred_check
        %p11 = pneg %p10
      $region7: #{custom-call.2} parent=4 // pred_check_branch
        %13 = sbr.rel (%p11) target = $region9
      $region8: #{custom-call.2} parent=4 // pred_region
        %s14 = ssub.s32 0, 1
        %s15 = smul.u32 %s14, 8
        %s16 = scalar_lea.vmem %s0, %s15
        %v17 = vld [vmem:[%s0] sm:$0xff]
        // While loop
        $region10: #{custom-call.2} parent=8 // loop_pre_header
          _
        $region11: #{custom-call.2} parent=8 // loop_header
          %s18 = sphi %s0, %s40
          %s19 = sphi [#allocation1], %s41
          %v20 = vphi %v17, %v42
          %s21 = ssub.s32 %s16, 64
          %p22 = scmp.gt.s32.totalorder %s18, %s21
        $region12: #{custom-call.2} parent=8 // loop_header_branch
          %24 = sbr.rel (%p22) target = $region16
        $region13: #{custom-call.2} parent=8 // loop_body
          %25 = vst [vmem:[%s19] sm:$0xff] %v20
          %v26 = vld [vmem:[%s18 + $0x8] sm:$0xff]
          %27 = vst [vmem:[%s19 + $0x8] sm:$0xff] %v26
          %v28 = vld [vmem:[%s18 + $0x10] sm:$0xff]
          %29 = vst [vmem:[%s19 + $0x10] sm:$0xff] %v28
          %v30 = vld [vmem:[%s18 + $0x18] sm:$0xff]
          %31 = vst [vmem:[%s19 + $0x18] sm:$0xff] %v30
          %v32 = vld [vmem:[%s18 + $0x20] sm:$0xff]
          %33 = vst [vmem:[%s19 + $0x20] sm:$0xff] %v32
          %v34 = vld [vmem:[%s18 + $0x28] sm:$0xff]
          %35 = vst [vmem:[%s19 + $0x28] sm:$0xff] %v34
          %v36 = vld [vmem:[%s18 + $0x30] sm:$0xff]
          %37 = vst [vmem:[%s19 + $0x30] sm:$0xff] %v36
          %v38 = vld [vmem:[%s18 + $0x38] sm:$0xff]
          %39 = vst [vmem:[%s19 + $0x38] sm:$0xff] %v38
        $region14: #{custom-call.2} parent=8 // loop_footer
          %s40 = scalar_lea.vmem %s18, 64
          %s41 = scalar_lea.vmem %s19, 64
          %v42 = vld [vmem:[%s18 + $0x40] sm:$0xff]
        $region15: #{custom-call.2} parent=8 // loop_footer_branch
          %43 = sbr.rel target = $region11
        $region16: #{custom-call.2} parent=8 // loop_exit
          _
        // While loop
        $region17: #{custom-call.2} parent=8 // loop_pre_header
          _
        $region18: #{custom-call.2} parent=8 // loop_header
          %s44 = sphi %s18, %s52
          %s45 = sphi %s19, %s53
          %v46 = vphi %v20, %v46
          %p47 = scmp.gt.s32.totalorder %s44, %s16
        $region19: #{custom-call.2} parent=8 // loop_header_branch
          %49 = sbr.rel (%p47) target = $region23
        $region20: #{custom-call.2} parent=8 // loop_body
          %v50 = vld [vmem:[%s44] sm:$0xff]
          %51 = vst [vmem:[%s45] sm:$0xff] %v50
        $region21: #{custom-call.2} parent=8 // loop_footer
          %s52 = scalar_lea.vmem %s44, 8
          %s53 = scalar_lea.vmem %s45, 8
        $region22: #{custom-call.2} parent=8 // loop_footer_branch
          %54 = sbr.rel target = $region18
        $region23: #{custom-call.2} parent=8 // loop_exit
          _
      $region9: #{custom-call.2} parent=4 // pred_fallthru
        _
      %s56 = ssub.s32 16, 1
      %s57 = smul.u32 0, 8
      %s58 = scalar_lea.vmem [#allocation1], %s57
      %s59 = smul.u32 0, 8
      %s60 = scalar_lea.vmem %s0, %s59
      %v61 = vld [vmem:[%s60] sm:%s56]
      %62 = vst [vmem:[%s58] sm:%s56] %v61
    $region5: #{custom-call.2} parent=1 // pred_fallthru
      _
    %s64 = ssub.s32 16, 1
    %v65 = vld [vmem:[#allocation1] sm:%s64]
    %66 = vst [vmem:[#allocation0] sm:%s64] %v65
    %v67 = vld [vmem:[#allocation0] sm:$0xff]
    %68 = vst [vmem:[#allocation2] sm:$0xff] %v67
    %69 = vst [vmem:[#allocation4] sm:$0x1] 0
    %v70 = vlaneseq
    %v71 = vshrl.u32 %v70, 7
    %v72 = vmov %v71
    %74 = vst [vmem:[#allocation10] sm:$0xff] %v72
    loop: start=0, step=1, limit=4
    $region25: #{custom-call.2} parent=1 // loop_pre_header
      _
    $region26: #{custom-call.2} parent=1 // loop_header
      %s76 = sphi 0, %s80
      %p77 = scmp.ge.s32.totalorder %s76, 4
    $region27: #{custom-call.2} parent=1 // loop_header_branch
      %79 = sbr.rel (%p77) target = $region31
    $region28: #{custom-call.2} parent=1 // loop_body
      %v81 = vstv %s76
      %v82 = vlaneseq
      %v83 = vshrl.u32 %v82, 7
      %v84 = vmov %v83
      %v85 = vld [vmem:[#allocation2] sm:$0xff]
      %v86 = vand.u32 2147483647, %v85
      %v88 = vstv %s76
      %vm89 = vcmp.ge.s32.totalorder %v84, %v88
      %vm90 = vcmp.lt.s32.totalorder %v84, 4
      %vm91 = vmand %vm89, %vm90
      %vm92 = vcmp.lt.f32.partialorder -inf, %v86
      %vm93 = vmand %vm91, %vm92
      %v94 = vsel %vm93, %v84, %v81
      %v95 = vsel %vm93, %v86, -inf
      %v96 = vrot.slane %v95, 1
      %v97 = vrot.slane %v94, 1
      %vm98 = vcmp.ge.f32.partialorder %v96, %v95
      %v99 = vsel %vm98, %v96, %v95
      %v100 = vsel %vm98, %v97, %v94
      %v101 = vrot.slane %v96, 1
      %v102 = vrot.slane %v97, 1
      %vm103 = vcmp.ge.f32.partialorder %v101, %v99
      %v104 = vsel %vm103, %v101, %v99
      %v105 = vsel %vm103, %v102, %v100
      %v106 = vrot.slane %v101, 1
      %v107 = vrot.slane %v102, 1
      %vm108 = vcmp.ge.f32.partialorder %v106, %v104
      %v109 = vsel %vm108, %v106, %v104
      %v110 = vsel %vm108, %v107, %v105
      %v111 = vrot.slane %v106, 1
      %v112 = vrot.slane %v107, 1
      %vm113 = vcmp.ge.f32.partialorder %v111, %v109
      %v114 = vsel %vm113, %v111, %v109
      %v115 = vsel %vm113, %v112, %v110
      %v116 = vrot.slane %v111, 1
      %v117 = vrot.slane %v112, 1
      %vm118 = vcmp.ge.f32.partialorder %v116, %v114
      %v119 = vsel %vm118, %v116, %v114
      %v120 = vsel %vm118, %v117, %v115
      %v121 = vrot.slane %v116, 1
      %v122 = vrot.slane %v117, 1
      %vm123 = vcmp.ge.f32.partialorder %v121, %v119
      %v124 = vsel %vm123, %v121, %v119
      %v125 = vsel %vm123, %v122, %v120
      %v126 = vrot.slane %v121, 1
      %v127 = vrot.slane %v122, 1
      %vm128 = vcmp.ge.f32.partialorder %v126, %v124
      %v129 = vsel %vm128, %v126, %v124
      %v130 = vsel %vm128, %v127, %v125
      %s131 = ssub.s32 128, %s76
      %132 = vrot.lane.b32.xlu0 %v130, %s131
      %v133 = vpop.permute.xlu0 %132
      %s134 = vtos %v133
      %v135 = vstv %s76
      %v136 = vlaneseq
      %v137 = vand.u32 %v136, 127
      %vm138 = vcmp.eq.s32.totalorder %v137, %v135
      %v139 = vstv %s134
      %v140 = vld [vmem:[#allocation4] ss:$0 sm:$0xff]
      %v141 = vsel %vm138, %v139, %v140
      %142 = vst [vmem:[#allocation4] sm:$0x1] %v141
      %s143 = scalar_lea.vmem [#allocation2], %s76
      %s144 = scalar_lea.vmem [#allocation2], %s134
      %v145 = vld [vmem:[%s143] ss:$0 sm:$0xff]
      %v146 = vld [vmem:[%s144] ss:$0 sm:$0xff]
      %147 = vst [vmem:[%s144] sm:$0x1] %v145
      %148 = vst [vmem:[%s143] sm:$0x1] %v146
      %s149 = scalar_lea.vmem [#allocation10], %s76
      %s150 = scalar_lea.vmem [#allocation10], %s134
      %v151 = vld [vmem:[%s149] ss:$0 sm:$0xff]
      %v152 = vld [vmem:[%s150] ss:$0 sm:$0xff]
      %153 = vst [vmem:[%s150] sm:$0x1] %v151
      %154 = vst [vmem:[%s149] sm:$0x1] %v152
      %vm155 = vcmp.ne.f32.partialorder %v146, 0.0
      %vm156 = vmand %vm138, %vm155
      %v157 = vsel %vm156, %v146, 1.0
      %v158 = vlaneseq
      %v159 = vand.u32 %v158, 127
      %v160 = vstv %s76
      %vm161 = vcmp.gt.s32.totalorder %v159, %v160
      %v162 = vsel %vm161, %v146, 0.0
      %v163 = vlaneseq
      %v164 = vshrl.u32 %v163, 7
      %v165 = vmov %v164
      %v166 = vld [vmem:[#allocation2] sm:$0xff]
      %v168 = vstv %s76
      %vm169 = vcmp.gt.s32.totalorder %v165, %v168
      %v170 = vsel %vm169, %v157, 1.0
      %v171 = vrcp.pop %v170
      %v172 = vmul.f32 %v170, %v171
      %v173 = vsub.f32 1.0, %v172
      %v174 = vmul.f32 %v171, %v173
      %v175 = vadd.f32 %v171, %v174
      %vm176 = vweird.f32 %v170
      %vm177 = vweird.f32 %v171
      %vm178 = vmor %vm176, %vm177
      %v179 = vsel %vm178, %v171, %v175
      %v180 = vand.u32 2147483647, %v170
      %vm181 = vcmp.eq.f32.partialorder %v180, 8.507059e+37
      %v182 = vand.u32 %v170, 2147483648
      %v183 = vor.u32 1.1754944e-38, %v182
      %v184 = vsel %vm181, %v183, %v179
      %v185 = vmul.f32 %v166, %v184
      %vm186 = vmand %vm169, %vm138
      %v187 = vsel %vm186, %v185, 0.0
      %188 = vadd.xlane.f32.xlu0 %v187
      %v189 = vpop.xlane.xlu0 %188
      %v190 = vmul.f32 %v189, %v162
      %v191 = vsub.f32 %v185, %v190
      %192 = vst [vmem:[#allocation2] sm:$0xff] %v191
    $region29: #{custom-call.2} parent=1 // loop_footer
      %s80 = sadd.s32 1, %s76
    $region30: #{custom-call.2} parent=1 // loop_footer_branch
      %75 = sbr.rel target = $region26
    $region31: #{custom-call.2} parent=1 // loop_exit
      _
    %v193 = vld [vmem:[#allocation10] sm:$0xff]
    %s194 = scalar_lea.vmem [#allocation10], 8
    %s195 = scalar_lea.vmem [#allocation10], 16
    %s196 = scalar_lea.vmem [#allocation10], 24
    %s197 = scalar_lea.vmem [#allocation10], 32
    %s198 = scalar_lea.vmem [#allocation10], 40
    %s199 = scalar_lea.vmem [#allocation10], 48
    %s200 = scalar_lea.vmem [#allocation10], 56
    %s201 = scalar_lea.vmem [#allocation10], 64
    %s202 = scalar_lea.vmem [#allocation10], 72
    %s203 = scalar_lea.vmem [#allocation10], 80
    %s204 = scalar_lea.vmem [#allocation10], 88
    %s205 = scalar_lea.vmem [#allocation10], 96
    %s206 = scalar_lea.vmem [#allocation10], 104
    %s207 = scalar_lea.vmem [#allocation10], 112
    %s208 = scalar_lea.vmem [#allocation10], 120
    %209 = vxpose.xlu0.b32.start [1/16] %v193, 128
    %210 = vxpose.xlu0.b32.cont [2/16] 0, 128
    %211 = vxpose.xlu0.b32.cont [3/16] 0, 128
    %212 = vxpose.xlu0.b32.cont [4/16] 0, 128
    %213 = vxpose.xlu0.b32.cont [5/16] 0, 128
    %214 = vxpose.xlu0.b32.cont [6/16] 0, 128
    %215 = vxpose.xlu0.b32.cont [7/16] 0, 128
    %216 = vxpose.xlu0.b32.cont [8/16] 0, 128
    %217 = vxpose.xlu0.b32.cont [9/16] 0, 128
    %218 = vxpose.xlu0.b32.cont [10/16] 0, 128
    %219 = vxpose.xlu0.b32.cont [11/16] 0, 128
    %220 = vxpose.xlu0.b32.cont [12/16] 0, 128
    %221 = vxpose.xlu0.b32.cont [13/16] 0, 128
    %222 = vxpose.xlu0.b32.cont [14/16] 0, 128
    %223 = vxpose.xlu0.b32.cont [15/16] 0, 128
    %224 = vxpose.xlu0.b32.end [16/16] 0, 128
    %v225 = vpop.trf.xlu0
    %v226 = vpop.trf.xlu0
    %v227 = vpop.trf.xlu0
    %v228 = vpop.trf.xlu0
    %v229 = vpop.trf.xlu0
    %v230 = vpop.trf.xlu0
    %v231 = vpop.trf.xlu0
    %v232 = vpop.trf.xlu0
    %v233 = vpop.trf.xlu0
    %v234 = vpop.trf.xlu0
    %v235 = vpop.trf.xlu0
    %v236 = vpop.trf.xlu0
    %v237 = vpop.trf.xlu0
    %v238 = vpop.trf.xlu0
    %v239 = vpop.trf.xlu0
    %v240 = vpop.trf.xlu0
    %241 = vst [vmem:[#allocation7] sm:$0x1] %v225
    %s243 = ssub.s32 16, 1
    %v244 = vld [vmem:[#allocation2] sm:%s243]
    %s246 = ssub.s32 16, 1
    %247 = vst [vmem:[#allocation3] sm:%s246] %v244
    %s249 = ssub.s32 2, 1
    %v250 = vld [vmem:[#allocation4] sm:%s249]
    %s252 = ssub.s32 2, 1
    %253 = vst [vmem:[#allocation5] sm:%s252] %v250
    %s255 = ssub.s32 2, 1
    %v256 = vld [vmem:[#allocation7] sm:%s255]
    %s258 = ssub.s32 2, 1
    %259 = vst [vmem:[#allocation8] sm:%s258] %v256
    // Predicated region
    $region32: #{custom-call.2} parent=1 // pred_check
      _
    $region33: #{custom-call.2} parent=1 // pred_check_branch
      %261 = sbr.rel (0) target = $region35
    $region34: #{custom-call.2} parent=1 // pred_region
      %p263 = scmp.gt.s32.totalorder 0, 0
      // Predicated region
      $region36: #{custom-call.2} parent=34 // pred_check
        %p264 = pneg %p263
      $region37: #{custom-call.2} parent=34 // pred_check_branch
        %266 = sbr.rel (%p264) target = $region39
      $region38: #{custom-call.2} parent=34 // pred_region
        %s267 = ssub.s32 0, 1
        %s268 = smul.u32 %s267, 8
        %s269 = scalar_lea.vmem [#allocation3], %s268
        %v270 = vld [vmem:[#allocation3] sm:$0xff]
        // While loop
        $region40: #{custom-call.2} parent=38 // loop_pre_header
          _
        $region41: #{custom-call.2} parent=38 // loop_header
          %s271 = sphi [#allocation3], %s293
          %s272 = sphi %s1, %s294
          %v273 = vphi %v270, %v295
          %s274 = ssub.s32 %s269, 64
          %p275 = scmp.gt.s32.totalorder %s271, %s274
        $region42: #{custom-call.2} parent=38 // loop_header_branch
          %277 = sbr.rel (%p275) target = $region46
        $region43: #{custom-call.2} parent=38 // loop_body
          %278 = vst [vmem:[%s272] sm:$0xff] %v273
          %v279 = vld [vmem:[%s271 + $0x8] sm:$0xff]
          %280 = vst [vmem:[%s272 + $0x8] sm:$0xff] %v279
          %v281 = vld [vmem:[%s271 + $0x10] sm:$0xff]
          %282 = vst [vmem:[%s272 + $0x10] sm:$0xff] %v281
          %v283 = vld [vmem:[%s271 + $0x18] sm:$0xff]
          %284 = vst [vmem:[%s272 + $0x18] sm:$0xff] %v283
          %v285 = vld [vmem:[%s271 + $0x20] sm:$0xff]
          %286 = vst [vmem:[%s272 + $0x20] sm:$0xff] %v285
          %v287 = vld [vmem:[%s271 + $0x28] sm:$0xff]
          %288 = vst [vmem:[%s272 + $0x28] sm:$0xff] %v287
          %v289 = vld [vmem:[%s271 + $0x30] sm:$0xff]
          %290 = vst [vmem:[%s272 + $0x30] sm:$0xff] %v289
          %v291 = vld [vmem:[%s271 + $0x38] sm:$0xff]
          %292 = vst [vmem:[%s272 + $0x38] sm:$0xff] %v291
        $region44: #{custom-call.2} parent=38 // loop_footer
          %s293 = scalar_lea.vmem %s271, 64
          %s294 = scalar_lea.vmem %s272, 64
          %v295 = vld [vmem:[%s271 + $0x40] sm:$0xff]
        $region45: #{custom-call.2} parent=38 // loop_footer_branch
          %296 = sbr.rel target = $region41
        $region46: #{custom-call.2} parent=38 // loop_exit
          _
        // While loop
        $region47: #{custom-call.2} parent=38 // loop_pre_header
          _
        $region48: #{custom-call.2} parent=38 // loop_header
          %s297 = sphi %s271, %s305
          %s298 = sphi %s272, %s306
          %v299 = vphi %v273, %v299
          %p300 = scmp.gt.s32.totalorder %s297, %s269
        $region49: #{custom-call.2} parent=38 // loop_header_branch
          %302 = sbr.rel (%p300) target = $region53
        $region50: #{custom-call.2} parent=38 // loop_body
          %v303 = vld [vmem:[%s297] sm:$0xff]
          %304 = vst [vmem:[%s298] sm:$0xff] %v303
        $region51: #{custom-call.2} parent=38 // loop_footer
          %s305 = scalar_lea.vmem %s297, 8
          %s306 = scalar_lea.vmem %s298, 8
        $region52: #{custom-call.2} parent=38 // loop_footer_branch
          %307 = sbr.rel target = $region48
        $region53: #{custom-call.2} parent=38 // loop_exit
          _
      $region39: #{custom-call.2} parent=34 // pred_fallthru
        _
      %s309 = ssub.s32 16, 1
      %s310 = smul.u32 0, 8
      %s311 = scalar_lea.vmem %s1, %s310
      %s312 = smul.u32 0, 8
      %s313 = scalar_lea.vmem [#allocation3], %s312
      %v314 = vld [vmem:[%s313] sm:%s309]
      %315 = vst [vmem:[%s311] sm:%s309] %v314
    $region35: #{custom-call.2} parent=1 // pred_fallthru
      _
    // Predicated region
    $region54: #{custom-call.2} parent=1 // pred_check
      _
    $region55: #{custom-call.2} parent=1 // pred_check_branch
      %317 = sbr.rel (0) target = $region57
    $region56: #{custom-call.2} parent=1 // pred_region
      %319 = vsyncadd [#allocation6], 0
      %s321 = sshll.u32 [#allocation5], 4
      %s322 = int_to_ptr.vmem [resolvable:$true] %s321
      %s323 = sshll.u32 %s2, 4
      %s324 = int_to_ptr.hbm [resolvable:$true] %s323
      %326 = dma.vmem_to_hbm [thread:$0]  %s322, 16, %s324, [#allocation6]
    $region57: #{custom-call.2} parent=1 // pred_fallthru
      _
    // Predicated region
    $region58: #{custom-call.2} parent=1 // pred_check
      _
    $region59: #{custom-call.2} parent=1 // pred_check_branch
      %328 = sbr.rel (0) target = $region61
    $region60: #{custom-call.2} parent=1 // pred_region
      %330 = vsyncadd [#allocation9], 0
      %s332 = sshll.u32 [#allocation8], 4
      %s333 = int_to_ptr.vmem [resolvable:$true] %s332
      %s334 = sshll.u32 %s3, 4
      %s335 = int_to_ptr.hbm [resolvable:$true] %s334
      %337 = dma.vmem_to_hbm [thread:$0]  %s333, 16, %s335, [#allocation9]
    $region61: #{custom-call.2} parent=1 // pred_fallthru
      _
    // Predicated region
    $region62: #{custom-call.2} parent=1 // pred_check
      _
    $region63: #{custom-call.2} parent=1 // pred_check_branch
      %339 = sbr.rel (0) target = $region65
    $region64: #{custom-call.2} parent=1 // pred_region
      %341 = dma.done [#allocation6], 16
    $region65: #{custom-call.2} parent=1 // pred_fallthru
      _
    // Predicated region
    $region66: #{custom-call.2} parent=1 // pred_check
      _
    $region67: #{custom-call.2} parent=1 // pred_check_branch
      %343 = sbr.rel (0) target = $region69
    $region68: #{custom-call.2} parent=1 // pred_region
      %345 = dma.done [#allocation9], 16
    $region69: #{custom-call.2} parent=1 // pred_fallthru
      _
    %346 = vsyncpa [#allocation6], 1
    %347 = vsyncpa [#allocation9], 1

// kernel: scoreflow_forward.1
$region0: #{scoreflow_forward.1}
  #allocation0 [shape = 'u32[]', space=smem, size = 0x4, offset = 0x4, fixed_abs, tag = 'smem constant byte address 0x4 - core index']
  #allocation1 [shape = 'u32[72,128]{1,0:T(1,128)}', space=vmem, size = 0x9000, scoped, tag = 'internal scratch']
  %s0 = inlined_call_operand.vmem [shape: f32[2,4,290], index: 0, kind: input, shape index: {}]
  %s1 = inlined_call_operand.vmem [shape: f32[9,4,4], index: 1, kind: input, shape index: {}]
  %s2 = inlined_call_operand.vmem [shape: f32[4,1], index: 2, kind: input, shape index: {}]
  %s3 = inlined_call_operand.vmem [shape: f32[2,4,256], index: 3, kind: output, shape index: {}]
  %s4 = sld [smem:[#allocation0]]
  $region45: #{scoreflow_forward.1} parent=0
    _
  %s6 = ssub.s32 1, %s4
  %s7 = scalar_select 0, %s6, %s4
  loop: start=0, step=1, limit=4
  $region2: #{scoreflow_forward.1} parent=0 // loop_pre_header
    _
  $region3: #{scoreflow_forward.1} parent=0 // loop_header
    %s9 = sphi 0, %s13
    %p10 = scmp.ge.s32.totalorder %s9, 4
    %s19 = sphi 0, %s21
    %s22 = sphi 0, %s19
    %s23 = sphi 0, %s22
    %s39 = sphi 0, %s23
    %s43 = sphi 0, %s43
    %s45 = sphi 0, %s43
    %s46 = sphi 0, %s45
    %s60 = sphi 0, %s46
    %s64 = sphi 0, %s64
    %s66 = sphi 0, %s64
    %s67 = sphi 0, %s66
    %s81 = sphi 0, %s67
    %s87 = sphi 0, %s89
    %s90 = sphi 0, %s87
    %s91 = sphi 0, %s90
    %s107 = sphi 0, %s91
  $region4: #{scoreflow_forward.1} parent=0 // loop_header_branch
    %12 = sbr.rel (%p10) target = $region8
  $region5: #{scoreflow_forward.1} parent=0 // loop_body
    %s14 = ssub.s32 %s9, 1
    %s15 = ssub.s32 %s9, 2
    %s16 = sadd.s32 %s9, 1
    %s17 = ssub.s32 %s9, %s16
    %p18 = scmp.eq.s32.totalorder %s17, 0
    %s20 = sadd.s32 %s19, 1
    %s21 = scalar_select %p18, %s19, %s20
    %p24 = pneg %p18
    %p25 = scmp.eq.s32.totalorder %s9, 1
    %p26 = por %p24, %p25
    %p27 = scmp.ne.s32.totalorder %s19, %s22
    %p28 = scmp.eq.s32.totalorder %s9, 0
    %p29 = por %p27, %p28
    %p30 = scmp.ne.s32.totalorder %s19, %s22
    %p31 = scmp.eq.s32.totalorder %s14, 1
    %p32 = por %p30, %p31
    %p33 = scmp.ne.s32.totalorder %s22, %s23
    %p34 = scmp.eq.s32.totalorder %s14, 0
    %p35 = por %p33, %p34
    %p36 = scmp.ne.s32.totalorder %s22, %s23
    %p37 = scmp.eq.s32.totalorder %s15, 1
    %p38 = por %p36, %p37
    %p40 = scmp.ne.s32.totalorder %s23, %s39
    %p41 = scmp.eq.s32.totalorder %s15, 0
    %p42 = por %p40, %p41
    %s44 = sadd.s32 %s43, 1
    %p47 = scmp.eq.s32.totalorder %s9, 1
    %p48 = scmp.ne.s32.totalorder %s43, %s45
    %p49 = scmp.eq.s32.totalorder %s9, 0
    %p50 = por %p48, %p49
    %p51 = scmp.ne.s32.totalorder %s43, %s45
    %p52 = scmp.eq.s32.totalorder %s14, 1
    %p53 = por %p51, %p52
    %p54 = scmp.ne.s32.totalorder %s45, %s46
    %p55 = scmp.eq.s32.totalorder %s14, 0
    %p56 = por %p54, %p55
    %p57 = scmp.ne.s32.totalorder %s45, %s46
    %p58 = scmp.eq.s32.totalorder %s15, 1
    %p59 = por %p57, %p58
    %p61 = scmp.ne.s32.totalorder %s46, %s60
    %p62 = scmp.eq.s32.totalorder %s15, 0
    %p63 = por %p61, %p62
    %s65 = sadd.s32 %s64, 1
    %p68 = scmp.eq.s32.totalorder %s9, 1
    %p69 = scmp.ne.s32.totalorder %s64, %s66
    %p70 = scmp.eq.s32.totalorder %s9, 0
    %p71 = por %p69, %p70
    %p72 = scmp.ne.s32.totalorder %s64, %s66
    %p73 = scmp.eq.s32.totalorder %s14, 1
    %p74 = por %p72, %p73
    %p75 = scmp.ne.s32.totalorder %s66, %s67
    %p76 = scmp.eq.s32.totalorder %s14, 0
    %p77 = por %p75, %p76
    %p78 = scmp.ne.s32.totalorder %s66, %s67
    %p79 = scmp.eq.s32.totalorder %s15, 1
    %p80 = por %p78, %p79
    %p82 = scmp.ne.s32.totalorder %s67, %s81
    %p83 = scmp.eq.s32.totalorder %s15, 0
    %p84 = por %p82, %p83
    %s85 = ssub.s32 %s9, %s16
    %p86 = scmp.eq.s32.totalorder %s85, 0
    %s88 = sadd.s32 %s87, 1
    %s89 = scalar_select %p86, %s87, %s88
    %p92 = pneg %p86
    %p93 = scmp.eq.s32.totalorder %s9, 1
    %p94 = por %p92, %p93
    %p95 = scmp.ne.s32.totalorder %s87, %s90
    %p96 = scmp.eq.s32.totalorder %s9, 0
    %p97 = por %p95, %p96
    %p98 = scmp.ne.s32.totalorder %s87, %s90
    %p99 = scmp.eq.s32.totalorder %s14, 1
    %p100 = por %p98, %p99
    %p101 = scmp.ne.s32.totalorder %s90, %s91
    %p102 = scmp.eq.s32.totalorder %s14, 0
    %p103 = por %p101, %p102
    %p104 = scmp.ne.s32.totalorder %s90, %s91
    %p105 = scmp.eq.s32.totalorder %s15, 1
    %p106 = por %p104, %p105
    %p108 = scmp.ne.s32.totalorder %s91, %s107
    %p109 = scmp.eq.s32.totalorder %s15, 0
    %p110 = por %p108, %p109
    %p111 = scmp.le.s32.totalorder 1, %s9
    %p112 = scmp.lt.s32.totalorder %s9, 3
    %p113 = pnand %p111, %p112
    %p114 = pneg %p113
    // Predicated region
    $region9: #{scoreflow_forward.1} parent=5 // pred_check
      _
    $region10: #{scoreflow_forward.1} parent=5 // pred_check_branch
      %116 = sbr.rel (%p113) target = $region12
    $region11: #{scoreflow_forward.1} parent=5 // pred_region
      %s117 = ssub.s32 %s9, 1
      // Predicated region
      $region13: #{scoreflow_forward.1} parent=11 // pred_check
        %p118 = pneg %p56
      $region14: #{scoreflow_forward.1} parent=11 // pred_check_branch
        %120 = sbr.rel (%p118) target = $region16
      $region15: #{scoreflow_forward.1} parent=11 // pred_region
        _
      $region16: #{scoreflow_forward.1} parent=11 // pred_fallthru
        _
      // Predicated region
      $region17: #{scoreflow_forward.1} parent=11 // pred_check
        %p121 = pneg %p77
      $region18: #{scoreflow_forward.1} parent=11 // pred_check_branch
        %123 = sbr.rel (%p121) target = $region20
      $region19: #{scoreflow_forward.1} parent=11 // pred_region
        _
      $region20: #{scoreflow_forward.1} parent=11 // pred_fallthru
        _
    $region12: #{scoreflow_forward.1} parent=5 // pred_fallthru
      _
    %p124 = scmp.lt.s32.totalorder %s9, 2
    // Predicated region
    $region21: #{scoreflow_forward.1} parent=5 // pred_check
      %p125 = pneg %p124
    $region22: #{scoreflow_forward.1} parent=5 // pred_check_branch
      %127 = sbr.rel (%p125) target = $region24
    $region23: #{scoreflow_forward.1} parent=5 // pred_region
      // Predicated region
      $region25: #{scoreflow_forward.1} parent=23 // pred_check
        %p128 = pneg %p29
      $region26: #{scoreflow_forward.1} parent=23 // pred_check_branch
        %130 = sbr.rel (%p128) target = $region28
      $region27: #{scoreflow_forward.1} parent=23 // pred_region
        %p131 = scmp.lt.s32.totalorder %s9, 1
        %s132 = scalar_select %p131, %s9, 1
        %s133 = smul.addr %s132, 3
        %s134 = smul.addr %s133, 4
        %s135 = scalar_lea.vmem %s0, %s134
      $region28: #{scoreflow_forward.1} parent=23 // pred_fallthru
        _
    $region24: #{scoreflow_forward.1} parent=5 // pred_fallthru
      _
    %p136 = scmp.le.s32.totalorder 1, %s9
    %p137 = scmp.lt.s32.totalorder %s9, 3
    %p138 = pnand %p136, %p137
    %p139 = pneg %p138
    // Predicated region
    $region29: #{scoreflow_forward.1} parent=5 // pred_check
      _
    $region30: #{scoreflow_forward.1} parent=5 // pred_check_branch
      %141 = sbr.rel (%p138) target = $region32
    $region31: #{scoreflow_forward.1} parent=5 // pred_region
      %s142 = ssub.s32 %s9, 1
      %p143 = scmp.lt.s32.totalorder %s14, 1
      %s144 = scalar_select %p143, %s14, 1
      %s145 = smul.addr %s144, 3
      %s146 = smul.addr %s145, 4
      %s147 = scalar_lea.vmem %s0, %s146
      %p148 = pneg %p35
      %p149 = pneg %p32
      %p150 = pneg %p56
      %p151 = pneg %p53
      %p152 = pneg %p77
      %p153 = pneg %p74
      %p154 = pneg %p103
      %p155 = pneg %p100
      %p156 = scmp.lt.s32.totalorder %s14, 1
      %s157 = scalar_select %p156, %s14, 1
      %s158 = smul.addr %s157, 2
      %s159 = smul.addr %s158, 4
      %s160 = scalar_lea.vmem %s3, %s159
      %p161 = scmp.lt.s32.totalorder %s14, 1
      %s162 = scalar_select %p161, %s14, 1
      %s163 = smul.addr %s162, 3
      %s164 = smul.addr %s163, 4
      %s165 = scalar_lea.vmem %s0, %s164
      %p166 = scmp.lt.s32.totalorder %s14, 1
      %s167 = scalar_select %p166, %s14, 1
      %s168 = smul.addr %s167, 2
      %s169 = smul.addr %s168, 4
      %s170 = scalar_lea.vmem %s3, %s169
      %v171 = vld [vmem:[%s1] sm:$0xf]
      %v172 = vld [vmem:[%s1 + $0x4] sm:$0xf]
      %v173 = vld [vmem:[%s1 + $0x8] sm:$0xf]
      %v174 = vld [vmem:[%s1 + $0xc] sm:$0xf]
      %v175 = vld [vmem:[%s1 + $0x10] sm:$0xf]
      %v176 = vld [vmem:[%s1 + $0x14] sm:$0xf]
      %v177 = vld [vmem:[%s1 + $0x18] sm:$0xf]
      %v178 = vld [vmem:[%s1 + $0x1c] sm:$0xf]
      %v179 = vld [vmem:[%s1 + $0x20] sm:$0xf]
      %v180 = vld [vmem:[%s2] sm:$0xf]
      %v181 = vlaneseq
      %v182 = vand.u32 %v181, 127
      %v183 = vadd.s32 %v182, 128
      %vm184 = vcmp.lt.s32.totalorder %v182, 0
      %v185 = vsub.s32 0, %v182
      %v186 = vsel %vm184, %v185, %v182
      %v187 = vshrl.u32 %v186, 4
      %v188 = vand.u32 %v186, 15
      %v189 = vsub.s32 0, %v188
      %v190 = vsel %vm184, %v189, %v188
      %vm191 = vcmp.lt.s32.totalorder %v183, 0
      %v192 = vsub.s32 0, %v183
      %v193 = vsel %vm191, %v192, %v183
      %v194 = vshrl.u32 %v193, 4
      %v195 = vand.u32 %v193, 15
      %v196 = vsub.s32 0, %v195
      %v197 = vsel %vm191, %v196, %v195
      %vm198 = vcmp.ne.s32.totalorder %v190, 0
      %vm199 = vcmp.ne.s32.totalorder %v197, 0
      %vm200 = vcmp.lt.s32.totalorder %v190, 0
      %vm201 = vcmp.lt.s32.totalorder %v197, 0
      %vm202 = vmand %vm200, %vm198
      %vm203 = vmand %vm201, %vm199
      %v204 = vadd.s32 %v190, 16
      %v205 = vadd.s32 %v197, 16
      %v206 = vsel %vm202, %v204, %v190
      %v207 = vsel %vm203, %v205, %v197
      %vm208 = vcmp.ge.s32.totalorder %v206, 1
      %vm209 = vcmp.ge.s32.totalorder %v207, 1
      %vm210 = vcmp.le.s32.totalorder %v206, 14
      %vm211 = vcmp.le.s32.totalorder %v207, 14
      %v212 = vld [vmem:[%s165] sm:$0xff]
      %v213 = vld [vmem:[%s165 + $0x8] sm:$0xf]
      %215 = vst [vmem:[#allocation1] ss:$2 sm:$0xff] %v212
      %v216 = vld.sshfl [vmem:[#allocation1] sm:$0xff pattern:$0x75316420]
      %v217 = vld.sshfl [vmem:[#allocation1 + $0x8] sm:$0xff pattern:$0x75316420]
      %v220 = vsel %vm208, %v216, 0.0
      %v221 = vsel %vm209, %v217, 0.0
      %223 = vst [vmem:[#allocation1] ss:$2 sm:$0xff] %v212
      %s224 = scalar_lea.vmem [#allocation1], 16
      %225 = vst [vmem:[%s224] ss:$2 sm:$0xff] %v213
      %v226 = vld.sshfl [vmem:[#allocation1] sm:$0xff pattern:$0x75316420]
      %v227 = vld.sshfl [vmem:[#allocation1 + $0x8] sm:$0xff pattern:$0x75316420]
      %v228 = vld.sshfl [vmem:[#allocation1 + $0x10] sm:$0xff pattern:$0x75316420]
      %229 = vrot.lane.b32.xlu0 %v226, 127
      %v230 = vpop.permute.xlu0 %229
      %231 = vrot.lane.b32.xlu0 %v227, 127
      %v232 = vpop.permute.xlu0 %231
      %233 = vrot.lane.b32.xlu0 %v228, 127
      %v234 = vpop.permute.xlu0 %233
      %vm235 = vcmask 1039360
      %v236 = vsel %vm235, %v230, %v232
      %v237 = vsel %vm235, %v232, %v234
      %vm238 = vcmask 31744
      %v240 = vsel %vm238, %v172, 0
      %vm242 = vcmask 1043456
      %v243 = vsel %vm242, %v236, 0
      %v245 = vsel %vm242, %v237, 0
      %247 = vmatpush.msra.mxu0 0.0
      %248 = vmatpush.msra.mxu0 0.0
      %249 = vmatpush.msra.mxu0 0.0
      %250 = vmatpush.msra.mxu0 0.0
      %251 = vmatpush.msra.mxu0 0.0
      %252 = vmatpush.msra.mxu0 0.0
      %253 = vmatpush.msra.mxu0 0.0
      %254 = vmatpush.msra.mxu0 0.0
      %255 = vmatpush.msra.mxu0 0.0
      %256 = vmatpush.msra.mxu0 0.0
      %257 = vmatpush.msra.mxu0 0.0
      %258 = vmatpush.msra.mxu0 0.0
      %259 = vmatpush.msra.mxu0 0.0
      %260 = vmatpush.msra.mxu0 0.0
      %261 = vmatpush.msra.mxu0 0.0
      %262 = vmatpush.msra.mxu0 %v243
      %263 = vmatmul.f32.gmra.mxu0 %v240
      %v264 = vpop.f32.mrf.mxu0
      %v265 = vadd.f32 0.0, %v264
      %266 = vdwg.mxu0
      %267 = vmatpush.msra.mxu0 0.0
      %268 = vmatpush.msra.mxu0 0.0
      %269 = vmatpush.msra.mxu0 0.0
      %270 = vmatpush.msra.mxu0 0.0
      %271 = vmatpush.msra.mxu0 0.0
      %272 = vmatpush.msra.mxu0 0.0
      %273 = vmatpush.msra.mxu0 0.0
      %274 = vmatpush.msra.mxu0 0.0
      %275 = vmatpush.msra.mxu0 0.0
      %276 = vmatpush.msra.mxu0 0.0
      %277 = vmatpush.msra.mxu0 0.0
      %278 = vmatpush.msra.mxu0 0.0
      %279 = vmatpush.msra.mxu0 0.0
      %280 = vmatpush.msra.mxu0 0.0
      %281 = vmatpush.msra.mxu0 0.0
      %282 = vmatpush.msra.mxu0 %v245
      %283 = vmatmul.f32.gmra.mxu0 %v240
      %v284 = vpop.f32.mrf.mxu0
      %v285 = vadd.f32 0.0, %v284
      %286 = vdwg.mxu0
      %v288 = vsel %vm238, %v171, 0
      %v291 = vsel %vm242, %v220, 0
      %v294 = vsel %vm242, %v221, 0
      %296 = vmatpush.msra.mxu0 0.0
      %297 = vmatpush.msra.mxu0 0.0
      %298 = vmatpush.msra.mxu0 0.0
      %299 = vmatpush.msra.mxu0 0.0
      %300 = vmatpush.msra.mxu0 0.0
      %301 = vmatpush.msra.mxu0 0.0
      %302 = vmatpush.msra.mxu0 0.0
      %303 = vmatpush.msra.mxu0 0.0
      %304 = vmatpush.msra.mxu0 0.0
      %305 = vmatpush.msra.mxu0 0.0
      %306 = vmatpush.msra.mxu0 0.0
      %307 = vmatpush.msra.mxu0 0.0
      %308 = vmatpush.msra.mxu0 0.0
      %309 = vmatpush.msra.mxu0 0.0
      %310 = vmatpush.msra.mxu0 0.0
      %311 = vmatpush.msra.mxu0 %v291
      %312 = vmatmul.f32.gmra.mxu0 %v288
      %v313 = vpop.f32.mrf.mxu0
      %v314 = vadd.f32 %v265, %v313
      %315 = vdwg.mxu0
      %316 = vmatpush.msra.mxu0 0.0
      %317 = vmatpush.msra.mxu0 0.0
      %318 = vmatpush.msra.mxu0 0.0
      %319 = vmatpush.msra.mxu0 0.0
      %320 = vmatpush.msra.mxu0 0.0
      %321 = vmatpush.msra.mxu0 0.0
      %322 = vmatpush.msra.mxu0 0.0
      %323 = vmatpush.msra.mxu0 0.0
      %324 = vmatpush.msra.mxu0 0.0
      %325 = vmatpush.msra.mxu0 0.0
      %326 = vmatpush.msra.mxu0 0.0
      %327 = vmatpush.msra.mxu0 0.0
      %328 = vmatpush.msra.mxu0 0.0
      %329 = vmatpush.msra.mxu0 0.0
      %330 = vmatpush.msra.mxu0 0.0
      %331 = vmatpush.msra.mxu0 %v294
      %332 = vmatmul.f32.gmra.mxu0 %v288
      %v333 = vpop.f32.mrf.mxu0
      %v334 = vadd.f32 %v285, %v333
      %335 = vdwg.mxu0
      %336 = vst [vmem:[#allocation1] ss:$2 sm:$0xff] %v212
      %s337 = scalar_lea.vmem [#allocation1], 16
      %338 = vst [vmem:[%s337] ss:$2 sm:$0xff] %v213
      %v339 = vld.sshfl [vmem:[#allocation1] sm:$0xff pattern:$0x75316420]
      %v340 = vld.sshfl [vmem:[#allocation1 + $0x8] sm:$0xff pattern:$0x75316420]
      %v341 = vld.sshfl [vmem:[#allocation1 + $0x10] sm:$0xff pattern:$0x75316420]
      %342 = vrot.lane.b32.xlu0 %v339, 126
      %v343 = vpop.permute.xlu0 %342
      %344 = vrot.lane.b32.xlu0 %v340, 126
      %v345 = vpop.permute.xlu0 %344
      %346 = vrot.lane.b32.xlu0 %v341, 126
      %v347 = vpop.permute.xlu0 %346
      %vm348 = vcmask 1031168
      %v349 = vsel %vm348, %v343, %v345
      %v350 = vsel %vm348, %v345, %v347
      %v353 = vsel %vm210, %v349, 0.0
      %v354 = vsel %vm211, %v350, 0.0
      %v356 = vsel %vm238, %v173, 0
      %v359 = vsel %vm242, %v353, 0
      %v362 = vsel %vm242, %v354, 0
      %364 = vmatpush.msra.mxu0 0.0
      %365 = vmatpush.msra.mxu0 0.0
      %366 = vmatpush.msra.mxu0 0.0
      %367 = vmatpush.msra.mxu0 0.0
      %368 = vmatpush.msra.mxu0 0.0
      %369 = vmatpush.msra.mxu0 0.0
      %370 = vmatpush.msra.mxu0 0.0
      %371 = vmatpush.msra.mxu0 0.0
      %372 = vmatpush.msra.mxu0 0.0
      %373 = vmatpush.msra.mxu0 0.0
      %374 = vmatpush.msra.mxu0 0.0
      %375 = vmatpush.msra.mxu0 0.0
      %376 = vmatpush.msra.mxu0 0.0
      %377 = vmatpush.msra.mxu0 0.0
      %378 = vmatpush.msra.mxu0 0.0
      %379 = vmatpush.msra.mxu0 %v359
      %380 = vmatmul.f32.gmra.mxu0 %v356
      %v381 = vpop.f32.mrf.mxu0
      %v382 = vadd.f32 0.0, %v381
      %383 = vdwg.mxu0
      %384 = vmatpush.msra.mxu0 0.0
      %385 = vmatpush.msra.mxu0 0.0
      %386 = vmatpush.msra.mxu0 0.0
      %387 = vmatpush.msra.mxu0 0.0
      %388 = vmatpush.msra.mxu0 0.0
      %389 = vmatpush.msra.mxu0 0.0
      %390 = vmatpush.msra.mxu0 0.0
      %391 = vmatpush.msra.mxu0 0.0
      %392 = vmatpush.msra.mxu0 0.0
      %393 = vmatpush.msra.mxu0 0.0
      %394 = vmatpush.msra.mxu0 0.0
      %395 = vmatpush.msra.mxu0 0.0
      %396 = vmatpush.msra.mxu0 0.0
      %397 = vmatpush.msra.mxu0 0.0
      %398 = vmatpush.msra.mxu0 0.0
      %399 = vmatpush.msra.mxu0 %v362
      %400 = vmatmul.f32.gmra.mxu0 %v356
      %v401 = vpop.f32.mrf.mxu0
      %v402 = vadd.f32 0.0, %v401
      %403 = vdwg.mxu0
      %v404 = vadd.f32 %v314, %v382
      %v405 = vadd.f32 %v334, %v402
      %406 = vst [vmem:[#allocation1] ss:$2 sm:$0xff] %v212
      %s407 = scalar_lea.vmem [#allocation1], 16
      %408 = vst [vmem:[%s407] ss:$2 sm:$0xff] %v213
      %v409 = vld.sshfl [vmem:[#allocation1] sm:$0xff pattern:$0x75316420]
      %v410 = vld.sshfl [vmem:[#allocation1 + $0x8] sm:$0xff pattern:$0x75316420]
      %v411 = vld.sshfl [vmem:[#allocation1 + $0x10] sm:$0xff pattern:$0x75316420]
      %412 = vrot.lane.b32.xlu0 %v409, 112
      %v413 = vpop.permute.xlu0 %412
      %414 = vrot.lane.b32.xlu0 %v410, 112
      %v415 = vpop.permute.xlu0 %414
      %416 = vrot.lane.b32.xlu0 %v411, 112
      %v417 = vpop.permute.xlu0 %416
      %vm418 = vcmask 916480
      %v419 = vsel %vm418, %v413, %v415
      %v420 = vsel %vm418, %v415, %v417
      %v423 = vsel %vm208, %v419, 0.0
      %v424 = vsel %vm209, %v420, 0.0
      %v426 = vsel %vm238, %v174, 0
      %v429 = vsel %vm242, %v423, 0
      %v432 = vsel %vm242, %v424, 0
      %434 = vmatpush.msra.mxu0 0.0
      %435 = vmatpush.msra.mxu0 0.0
      %436 = vmatpush.msra.mxu0 0.0
      %437 = vmatpush.msra.mxu0 0.0
      %438 = vmatpush.msra.mxu0 0.0
      %439 = vmatpush.msra.mxu0 0.0
      %440 = vmatpush.msra.mxu0 0.0
      %441 = vmatpush.msra.mxu0 0.0
      %442 = vmatpush.msra.mxu0 0.0
      %443 = vmatpush.msra.mxu0 0.0
      %444 = vmatpush.msra.mxu0 0.0
      %445 = vmatpush.msra.mxu0 0.0
      %446 = vmatpush.msra.mxu0 0.0
      %447 = vmatpush.msra.mxu0 0.0
      %448 = vmatpush.msra.mxu0 0.0
      %449 = vmatpush.msra.mxu0 %v429
      %450 = vmatmul.f32.gmra.mxu0 %v426
      %v451 = vpop.f32.mrf.mxu0
      %v452 = vadd.f32 0.0, %v451
      %453 = vdwg.mxu0
      %454 = vmatpush.msra.mxu0 0.0
      %455 = vmatpush.msra.mxu0 0.0
      %456 = vmatpush.msra.mxu0 0.0
      %457 = vmatpush.msra.mxu0 0.0
      %458 = vmatpush.msra.mxu0 0.0
      %459 = vmatpush.msra.mxu0 0.0
      %460 = vmatpush.msra.mxu0 0.0
      %461 = vmatpush.msra.mxu0 0.0
      %462 = vmatpush.msra.mxu0 0.0
      %463 = vmatpush.msra.mxu0 0.0
      %464 = vmatpush.msra.mxu0 0.0
      %465 = vmatpush.msra.mxu0 0.0
      %466 = vmatpush.msra.mxu0 0.0
      %467 = vmatpush.msra.mxu0 0.0
      %468 = vmatpush.msra.mxu0 0.0
      %469 = vmatpush.msra.mxu0 %v432
      %470 = vmatmul.f32.gmra.mxu0 %v426
      %v471 = vpop.f32.mrf.mxu0
      %v472 = vadd.f32 0.0, %v471
      %473 = vdwg.mxu0
      %v474 = vadd.f32 %v404, %v452
      %v475 = vadd.f32 %v405, %v472
      %476 = vst [vmem:[#allocation1] ss:$2 sm:$0xff] %v212
      %s477 = scalar_lea.vmem [#allocation1], 16
      %478 = vst [vmem:[%s477] ss:$2 sm:$0xff] %v213
      %v479 = vld.sshfl [vmem:[#allocation1] sm:$0xff pattern:$0x75316420]
      %v480 = vld.sshfl [vmem:[#allocation1 + $0x8] sm:$0xff pattern:$0x75316420]
      %v481 = vld.sshfl [vmem:[#allocation1 + $0x10] sm:$0xff pattern:$0x75316420]
      %482 = vrot.lane.b32.xlu0 %v479, 111
      %v483 = vpop.permute.xlu0 %482
      %484 = vrot.lane.b32.xlu0 %v480, 111
      %v485 = vpop.permute.xlu0 %484
      %486 = vrot.lane.b32.xlu0 %v481, 111
      %v487 = vpop.permute.xlu0 %486
      %vm488 = vcmask 908288
      %v489 = vsel %vm488, %v483, %v485
      %v490 = vsel %vm488, %v485, %v487
      %v492 = vsel %vm238, %v175, 0
      %v494 = vsel %vm242, %v489, 0
      %v496 = vsel %vm242, %v490, 0
      %498 = vmatpush.msra.mxu0 0.0
      %499 = vmatpush.msra.mxu0 0.0
      %500 = vmatpush.msra.mxu0 0.0
      %501 = vmatpush.msra.mxu0 0.0
      %502 = vmatpush.msra.mxu0 0.0
      %503 = vmatpush.msra.mxu0 0.0
      %504 = vmatpush.msra.mxu0 0.0
      %505 = vmatpush.msra.mxu0 0.0
      %506 = vmatpush.msra.mxu0 0.0
      %507 = vmatpush.msra.mxu0 0.0
      %508 = vmatpush.msra.mxu0 0.0
      %509 = vmatpush.msra.mxu0 0.0
      %510 = vmatpush.msra.mxu0 0.0
      %511 = vmatpush.msra.mxu0 0.0
      %512 = vmatpush.msra.mxu0 0.0
      %513 = vmatpush.msra.mxu0 %v494
      %514 = vmatmul.f32.gmra.mxu0 %v492
      %v515 = vpop.f32.mrf.mxu0
      %v516 = vadd.f32 0.0, %v515
      %517 = vdwg.mxu0
      %518 = vmatpush.msra.mxu0 0.0
      %519 = vmatpush.msra.mxu0 0.0
      %520 = vmatpush.msra.mxu0 0.0
      %521 = vmatpush.msra.mxu0 0.0
      %522 = vmatpush.msra.mxu0 0.0
      %523 = vmatpush.msra.mxu0 0.0
      %524 = vmatpush.msra.mxu0 0.0
      %525 = vmatpush.msra.mxu0 0.0
      %526 = vmatpush.msra.mxu0 0.0
      %527 = vmatpush.msra.mxu0 0.0
      %528 = vmatpush.msra.mxu0 0.0
      %529 = vmatpush.msra.mxu0 0.0
      %530 = vmatpush.msra.mxu0 0.0
      %531 = vmatpush.msra.mxu0 0.0
      %532 = vmatpush.msra.mxu0 0.0
      %533 = vmatpush.msra.mxu0 %v496
      %534 = vmatmul.f32.gmra.mxu0 %v492
      %v535 = vpop.f32.mrf.mxu0
      %v536 = vadd.f32 0.0, %v535
      %537 = vdwg.mxu0
      %v538 = vadd.f32 %v474, %v516
      %v539 = vadd.f32 %v475, %v536
      %540 = vst [vmem:[#allocation1] ss:$2 sm:$0xff] %v212
      %s541 = scalar_lea.vmem [#allocation1], 16
      %542 = vst [vmem:[%s541] ss:$2 sm:$0xff] %v213
      %v543 = vld.sshfl [vmem:[#allocation1] sm:$0xff pattern:$0x75316420]
      %v544 = vld.sshfl [vmem:[#allocation1 + $0x8] sm:$0xff pattern:$0x75316420]
      %v545 = vld.sshfl [vmem:[#allocation1 + $0x10] sm:$0xff pattern:$0x75316420]
      %546 = vrot.lane.b32.xlu0 %v543, 110
      %v547 = vpop.permute.xlu0 %546
      %548 = vrot.lane.b32.xlu0 %v544, 110
      %v549 = vpop.permute.xlu0 %548
      %550 = vrot.lane.b32.xlu0 %v545, 110
      %v551 = vpop.permute.xlu0 %550
      %vm552 = vcmask 900096
      %v553 = vsel %vm552, %v547, %v549
      %v554 = vsel %vm552, %v549, %v551
      %v557 = vsel %vm210, %v553, 0.0
      %v558 = vsel %vm211, %v554, 0.0
      %v560 = vsel %vm238, %v176, 0
      %v563 = vsel %vm242, %v557, 0
      %v566 = vsel %vm242, %v558, 0
      %568 = vmatpush.msra.mxu0 0.0
      %569 = vmatpush.msra.mxu0 0.0
      %570 = vmatpush.msra.mxu0 0.0
      %571 = vmatpush.msra.mxu0 0.0
      %572 = vmatpush.msra.mxu0 0.0
      %573 = vmatpush.msra.mxu0 0.0
      %574 = vmatpush.msra.mxu0 0.0
      %575 = vmatpush.msra.mxu0 0.0
      %576 = vmatpush.msra.mxu0 0.0
      %577 = vmatpush.msra.mxu0 0.0
      %578 = vmatpush.msra.mxu0 0.0
      %579 = vmatpush.msra.mxu0 0.0
      %580 = vmatpush.msra.mxu0 0.0
      %581 = vmatpush.msra.mxu0 0.0
      %582 = vmatpush.msra.mxu0 0.0
      %583 = vmatpush.msra.mxu0 %v563
      %584 = vmatmul.f32.gmra.mxu0 %v560
      %v585 = vpop.f32.mrf.mxu0
      %v586 = vadd.f32 0.0, %v585
      %587 = vdwg.mxu0
      %588 = vmatpush.msra.mxu0 0.0
      %589 = vmatpush.msra.mxu0 0.0
      %590 = vmatpush.msra.mxu0 0.0
      %591 = vmatpush.msra.mxu0 0.0
      %592 = vmatpush.msra.mxu0 0.0
      %593 = vmatpush.msra.mxu0 0.0
      %594 = vmatpush.msra.mxu0 0.0
      %595 = vmatpush.msra.mxu0 0.0
      %596 = vmatpush.msra.mxu0 0.0
      %597 = vmatpush.msra.mxu0 0.0
      %598 = vmatpush.msra.mxu0 0.0
      %599 = vmatpush.msra.mxu0 0.0
      %600 = vmatpush.msra.mxu0 0.0
      %601 = vmatpush.msra.mxu0 0.0
      %602 = vmatpush.msra.mxu0 0.0
      %603 = vmatpush.msra.mxu0 %v566
      %604 = vmatmul.f32.gmra.mxu0 %v560
      %v605 = vpop.f32.mrf.mxu0
      %v606 = vadd.f32 0.0, %v605
      %607 = vdwg.mxu0
      %v608 = vadd.f32 %v538, %v586
      %v609 = vadd.f32 %v539, %v606
      %610 = vst [vmem:[#allocation1] ss:$2 sm:$0xff] %v212
      %s611 = scalar_lea.vmem [#allocation1], 16
      %612 = vst [vmem:[%s611] ss:$2 sm:$0xff] %v213
      %v613 = vld.sshfl [vmem:[#allocation1] sm:$0xff pattern:$0x75316420]
      %v614 = vld.sshfl [vmem:[#allocation1 + $0x8] sm:$0xff pattern:$0x75316420]
      %v615 = vld.sshfl [vmem:[#allocation1 + $0x10] sm:$0xff pattern:$0x75316420]
      %616 = vrot.lane.b32.xlu0 %v613, 96
      %v617 = vpop.permute.xlu0 %616
      %618 = vrot.lane.b32.xlu0 %v614, 96
      %v619 = vpop.permute.xlu0 %618
      %620 = vrot.lane.b32.xlu0 %v615, 96
      %v621 = vpop.permute.xlu0 %620
      %vm622 = vcmask 785408
      %v623 = vsel %vm622, %v617, %v619
      %v624 = vsel %vm622, %v619, %v621
      %v627 = vsel %vm208, %v623, 0.0
      %v628 = vsel %vm209, %v624, 0.0
      %v630 = vsel %vm238, %v177, 0
      %v633 = vsel %vm242, %v627, 0
      %v636 = vsel %vm242, %v628, 0
      %638 = vmatpush.msra.mxu0 0.0
      %639 = vmatpush.msra.mxu0 0.0
      %640 = vmatpush.msra.mxu0 0.0
      %641 = vmatpush.msra.mxu0 0.0
      %642 = vmatpush.msra.mxu0 0.0
      %643 = vmatpush.msra.mxu0 0.0
      %644 = vmatpush.msra.mxu0 0.0
      %645 = vmatpush.msra.mxu0 0.0
      %646 = vmatpush.msra.mxu0 0.0
      %647 = vmatpush.msra.mxu0 0.0
      %648 = vmatpush.msra.mxu0 0.0
      %649 = vmatpush.msra.mxu0 0.0
      %650 = vmatpush.msra.mxu0 0.0
      %651 = vmatpush.msra.mxu0 0.0
      %652 = vmatpush.msra.mxu0 0.0
      %653 = vmatpush.msra.mxu0 %v633
      %654 = vmatmul.f32.gmra.mxu0 %v630
      %v655 = vpop.f32.mrf.mxu0
      %v656 = vadd.f32 0.0, %v655
      %657 = vdwg.mxu0
      %658 = vmatpush.msra.mxu0 0.0
      %659 = vmatpush.msra.mxu0 0.0
      %660 = vmatpush.msra.mxu0 0.0
      %661 = vmatpush.msra.mxu0 0.0
      %662 = vmatpush.msra.mxu0 0.0
      %663 = vmatpush.msra.mxu0 0.0
      %664 = vmatpush.msra.mxu0 0.0
      %665 = vmatpush.msra.mxu0 0.0
      %666 = vmatpush.msra.mxu0 0.0
      %667 = vmatpush.msra.mxu0 0.0
      %668 = vmatpush.msra.mxu0 0.0
      %669 = vmatpush.msra.mxu0 0.0
      %670 = vmatpush.msra.mxu0 0.0
      %671 = vmatpush.msra.mxu0 0.0
      %672 = vmatpush.msra.mxu0 0.0
      %673 = vmatpush.msra.mxu0 %v636
      %674 = vmatmul.f32.gmra.mxu0 %v630
      %v675 = vpop.f32.mrf.mxu0
      %v676 = vadd.f32 0.0, %v675
      %677 = vdwg.mxu0
      %v678 = vadd.f32 %v608, %v656
      %v679 = vadd.f32 %v609, %v676
      %680 = vst [vmem:[#allocation1] ss:$2 sm:$0xff] %v212
      %s681 = scalar_lea.vmem [#allocation1], 16
      %682 = vst [vmem:[%s681] ss:$2 sm:$0xff] %v213
      %v683 = vld.sshfl [vmem:[#allocation1] sm:$0xff pattern:$0x75316420]
      %v684 = vld.sshfl [vmem:[#allocation1 + $0x8] sm:$0xff pattern:$0x75316420]
      %v685 = vld.sshfl [vmem:[#allocation1 + $0x10] sm:$0xff pattern:$0x75316420]
      %686 = vrot.lane.b32.xlu0 %v683, 95
      %v687 = vpop.permute.xlu0 %686
      %688 = vrot.lane.b32.xlu0 %v684, 95
      %v689 = vpop.permute.xlu0 %688
      %690 = vrot.lane.b32.xlu0 %v685, 95
      %v691 = vpop.permute.xlu0 %690
      %vm692 = vcmask 777216
      %v693 = vsel %vm692, %v687, %v689
      %v694 = vsel %vm692, %v689, %v691
      %v696 = vsel %vm238, %v178, 0
      %v698 = vsel %vm242, %v693, 0
      %v700 = vsel %vm242, %v694, 0
      %702 = vmatpush.msra.mxu0 0.0
      %703 = vmatpush.msra.mxu0 0.0
      %704 = vmatpush.msra.mxu0 0.0
      %705 = vmatpush.msra.mxu0 0.0
      %706 = vmatpush.msra.mxu0 0.0
      %707 = vmatpush.msra.mxu0 0.0
      %708 = vmatpush.msra.mxu0 0.0
      %709 = vmatpush.msra.mxu0 0.0
      %710 = vmatpush.msra.mxu0 0.0
      %711 = vmatpush.msra.mxu0 0.0
      %712 = vmatpush.msra.mxu0 0.0
      %713 = vmatpush.msra.mxu0 0.0
      %714 = vmatpush.msra.mxu0 0.0
      %715 = vmatpush.msra.mxu0 0.0
      %716 = vmatpush.msra.mxu0 0.0
      %717 = vmatpush.msra.mxu0 %v698
      %718 = vmatmul.f32.gmra.mxu0 %v696
      %v719 = vpop.f32.mrf.mxu0
      %v720 = vadd.f32 0.0, %v719
      %721 = vdwg.mxu0
      %722 = vmatpush.msra.mxu0 0.0
      %723 = vmatpush.msra.mxu0 0.0
      %724 = vmatpush.msra.mxu0 0.0
      %725 = vmatpush.msra.mxu0 0.0
      %726 = vmatpush.msra.mxu0 0.0
      %727 = vmatpush.msra.mxu0 0.0
      %728 = vmatpush.msra.mxu0 0.0
      %729 = vmatpush.msra.mxu0 0.0
      %730 = vmatpush.msra.mxu0 0.0
      %731 = vmatpush.msra.mxu0 0.0
      %732 = vmatpush.msra.mxu0 0.0
      %733 = vmatpush.msra.mxu0 0.0
      %734 = vmatpush.msra.mxu0 0.0
      %735 = vmatpush.msra.mxu0 0.0
      %736 = vmatpush.msra.mxu0 0.0
      %737 = vmatpush.msra.mxu0 %v700
      %738 = vmatmul.f32.gmra.mxu0 %v696
      %v739 = vpop.f32.mrf.mxu0
      %v740 = vadd.f32 0.0, %v739
      %741 = vdwg.mxu0
      %v742 = vadd.f32 %v678, %v720
      %v743 = vadd.f32 %v679, %v740
      %744 = vst [vmem:[#allocation1] ss:$2 sm:$0xff] %v212
      %s745 = scalar_lea.vmem [#allocation1], 16
      %746 = vst [vmem:[%s745] ss:$2 sm:$0xff] %v213
      %v747 = vld.sshfl [vmem:[#allocation1] sm:$0xff pattern:$0x75316420]
      %v748 = vld.sshfl [vmem:[#allocation1 + $0x8] sm:$0xff pattern:$0x75316420]
      %v749 = vld.sshfl [vmem:[#allocation1 + $0x10] sm:$0xff pattern:$0x75316420]
      %750 = vrot.lane.b32.xlu0 %v747, 94
      %v751 = vpop.permute.xlu0 %750
      %752 = vrot.lane.b32.xlu0 %v748, 94
      %v753 = vpop.permute.xlu0 %752
      %754 = vrot.lane.b32.xlu0 %v749, 94
      %v755 = vpop.permute.xlu0 %754
      %vm756 = vcmask 769024
      %v757 = vsel %vm756, %v751, %v753
      %v758 = vsel %vm756, %v753, %v755
      %v761 = vsel %vm210, %v757, 0.0
      %v762 = vsel %vm211, %v758, 0.0
      %v764 = vsel %vm238, %v179, 0
      %v767 = vsel %vm242, %v761, 0
      %v770 = vsel %vm242, %v762, 0
      %772 = vmatpush.msra.mxu0 0.0
      %773 = vmatpush.msra.mxu0 0.0
      %774 = vmatpush.msra.mxu0 0.0
      %775 = vmatpush.msra.mxu0 0.0
      %776 = vmatpush.msra.mxu0 0.0
      %777 = vmatpush.msra.mxu0 0.0
      %778 = vmatpush.msra.mxu0 0.0
      %779 = vmatpush.msra.mxu0 0.0
      %780 = vmatpush.msra.mxu0 0.0
      %781 = vmatpush.msra.mxu0 0.0
      %782 = vmatpush.msra.mxu0 0.0
      %783 = vmatpush.msra.mxu0 0.0
      %784 = vmatpush.msra.mxu0 0.0
      %785 = vmatpush.msra.mxu0 0.0
      %786 = vmatpush.msra.mxu0 0.0
      %787 = vmatpush.msra.mxu0 %v767
      %788 = vmatmul.f32.gmra.mxu0 %v764
      %v789 = vpop.f32.mrf.mxu0
      %v790 = vadd.f32 0.0, %v789
      %791 = vdwg.mxu0
      %792 = vmatpush.msra.mxu0 0.0
      %793 = vmatpush.msra.mxu0 0.0
      %794 = vmatpush.msra.mxu0 0.0
      %795 = vmatpush.msra.mxu0 0.0
      %796 = vmatpush.msra.mxu0 0.0
      %797 = vmatpush.msra.mxu0 0.0
      %798 = vmatpush.msra.mxu0 0.0
      %799 = vmatpush.msra.mxu0 0.0
      %800 = vmatpush.msra.mxu0 0.0
      %801 = vmatpush.msra.mxu0 0.0
      %802 = vmatpush.msra.mxu0 0.0
      %803 = vmatpush.msra.mxu0 0.0
      %804 = vmatpush.msra.mxu0 0.0
      %805 = vmatpush.msra.mxu0 0.0
      %806 = vmatpush.msra.mxu0 0.0
      %807 = vmatpush.msra.mxu0 %v770
      %808 = vmatmul.f32.gmra.mxu0 %v764
      %v809 = vpop.f32.mrf.mxu0
      %v810 = vadd.f32 0.0, %v809
      %811 = vdwg.mxu0
      %v812 = vadd.f32 %v742, %v790
      %v813 = vadd.f32 %v743, %v810
      %815 = vset.pattern.permute.xlu0 0
      %816 = vperm.xlu0 %815, %v180
      %v817 = vpop.permute.xlu0 %816
      %v819 = vadd.f32 %v812, %v817
      %v820 = vadd.f32 %v813, %v817
      %v823 = vrot.slane %v820, 4
      %v824 = vsel %vm242, %v819, %v823
      %826 = vst [vmem:[%s170] sm:$0xff] %v824
      %p827 = scmp.lt.s32.totalorder %s14, 1
      %s828 = scalar_select %p827, %s14, 1
      %s829 = smul.addr %s828, 2
      %s830 = smul.addr %s829, 4
      %s831 = scalar_lea.vmem %s3, %s830
      // Predicated region
      $region33: #{scoreflow_forward.1} parent=31 // pred_check
        %p832 = pneg %p100
      $region34: #{scoreflow_forward.1} parent=31 // pred_check_branch
        %834 = sbr.rel (%p832) target = $region36
      $region35: #{scoreflow_forward.1} parent=31 // pred_region
        _
      $region36: #{scoreflow_forward.1} parent=31 // pred_fallthru
        _
    $region32: #{scoreflow_forward.1} parent=5 // pred_fallthru
      _
    %p835 = scmp.le.s32.totalorder 2, %s9
    // Predicated region
    $region37: #{scoreflow_forward.1} parent=5 // pred_check
      %p836 = pneg %p835
    $region38: #{scoreflow_forward.1} parent=5 // pred_check_branch
      %838 = sbr.rel (%p836) target = $region40
    $region39: #{scoreflow_forward.1} parent=5 // pred_region
      %s839 = ssub.s32 %s9, 2
      // Predicated region
      $region41: #{scoreflow_forward.1} parent=39 // pred_check
        %p840 = pneg %p106
      $region42: #{scoreflow_forward.1} parent=39 // pred_check_branch
        %842 = sbr.rel (%p840) target = $region44
      $region43: #{scoreflow_forward.1} parent=39 // pred_region
        %p843 = scmp.lt.s32.totalorder %s15, 1
        %s844 = scalar_select %p843, %s15, 1
        %s845 = smul.addr %s844, 2
        %s846 = smul.addr %s845, 4
        %s847 = scalar_lea.vmem %s3, %s846
      $region44: #{scoreflow_forward.1} parent=39 // pred_fallthru
        _
    $region40: #{scoreflow_forward.1} parent=5 // pred_fallthru
      _
  $region6: #{scoreflow_forward.1} parent=0 // loop_footer
    %s13 = sadd.s32 1, %s9
  $region7: #{scoreflow_forward.1} parent=0 // loop_footer_branch
    %8 = sbr.rel target = $region3
  $region8: #{scoreflow_forward.1} parent=0 // loop_exit
    _

</llo_original>
